<compile_context>
chip_gen: v7x
topology: tpu7x:2x2x1
jax: 0.10.0
libtpu: 0.0.40
codegen_flags: <defaults>
</compile_context>

<pallas_src>
import math
from functools import partial

import numpy as np
import jax
import jax.numpy as jnp
from jax.experimental import pallas as pl
from jax.experimental.pallas import tpu as pltpu

LANE = 128


# ---------------------------------------------------------------------------
# Pallas kernel: one folded matmul per row tile.
#   x_ref: (TN, KC)  bf16   (gathered activations, KC = K_pad*Cin)
#   w_ref: (KC, 128) bf16   (VMEM-resident folded weights, Cout padded to 128)
#   b_ref: (1, 128)  f32    (VMEM-resident padded bias)
#   o_ref: (TN, 128) bf16   (lane-dense bf16 output -> halved writeback bytes)
# ---------------------------------------------------------------------------
def _spconv_kernel(x_ref, w_ref, b_ref, o_ref):
    acc = jnp.dot(x_ref[...], w_ref[...], preferred_element_type=jnp.float32)
    o_ref[...] = (acc + b_ref[...]).astype(o_ref.dtype)


def spconv_folded_matmul(x, w, b, *, tn):
    """x: (N_pad, KC) bf16, w: (KC, 128) bf16, b: (1, 128) f32 -> (N_pad, 128) bf16."""
    n_pad, kc = x.shape
    assert n_pad % tn == 0 and w.shape == (kc, LANE) and b.shape == (1, LANE)
    return pl.pallas_call(
        _spconv_kernel,
        out_shape=jax.ShapeDtypeStruct((n_pad, LANE), jnp.bfloat16),
        grid_spec=pltpu.PrefetchScalarGridSpec(
            num_scalar_prefetch=0,
            grid=(n_pad // tn,),
            in_specs=[
                pl.BlockSpec((tn, kc), lambda i: (i, 0)),     # activations, tiled rows
                pl.BlockSpec((kc, LANE), lambda i: (0, 0)),   # weights, VMEM-resident
                pl.BlockSpec((1, LANE), lambda i: (0, 0)),    # bias, VMEM-resident
            ],
            out_specs=pl.BlockSpec((tn, LANE), lambda i: (i, 0)),
        ),
        compiler_params=pltpu.CompilerParams(
            dimension_semantics=("parallel",),
            vmem_limit_bytes=32 * 1024 * 1024,
        ),
    )(x, w, b)


def _choose_row_tile(n, kc):
    """Largest row tile such that (a) >= 4 grid steps (v7x dual-TC pipelining)
    and (b) double-buffered activation+output tiles stay well under the 32 MiB
    scoped VMEM default (and v7x's 64 MiB physical)."""
    budget = 24 * 1024 * 1024
    for tn in (2048, 1024, 512, 256):
        vmem = 2 * tn * kc * 2 + 2 * tn * LANE * 2   # x + out, double-buffered, bf16
        if n >= 4 * tn and vmem <= budget:
            return tn
    return 128


@partial(jax.jit, static_argnames=("tn", "nnz", "cout"))
def _spconv_forward(feats_ext_bf16, gidx, w_flat, b_pad, *, tn, nnz, cout):
    """feats_ext_bf16: (nnz+1, Cin) bf16 (last row zeros), gidx: (N_pad, K_pad) i32."""
    n_pad, k_pad = gidx.shape
    cin = feats_ext_bf16.shape[1]
    # Gather in bf16 (never materialize an f32 slab), fold K into the contraction.
    x = feats_ext_bf16[gidx].reshape(n_pad, k_pad * cin)
    out = spconv_folded_matmul(x, w_flat, b_pad, tn=tn)           # (n_pad, 128) bf16
    return out[:nnz, :cout].astype(jnp.float32)


# ---------------------------------------------------------------------------
# conv3d module equivalent (submanifold case: stride=1, default config).
# ---------------------------------------------------------------------------
class Conv3dPallas:
    def __init__(self, in_channels=16, out_channels=32, kernel_size=3,
                 stride=1, padding=0, bias=False, key=None):
        if isinstance(kernel_size, int):
            kernel_size = [kernel_size] * 3
        if isinstance(stride, int):
            stride = [stride] * 3
        assert list(stride) == [1, 1, 1], \
            "only the submanifold (stride=1) path is implemented"
        self.in_channels = in_channels
        self.out_channels = out_channels
        self.kernel_size = list(kernel_size)
        self.padding = padding  # ignored on the submanifold path (as in conv_func)
        self.kernel_volume = int(np.prod(self.kernel_size))

        # reset_parameters(): uniform(-stdv, stdv), stdv = 1/sqrt(out_ch * kvol)
        n = out_channels * self.kernel_volume
        stdv = 1.0 / math.sqrt(n)
        key = jax.random.PRNGKey(42) if key is None else key
        kkey, bkey = jax.random.split(key)
        if self.kernel_volume > 1:
            kshape = (self.kernel_volume, in_channels, out_channels)
        else:
            kshape = (in_channels, out_channels)
        self.kernel = jax.random.uniform(kkey, kshape, jnp.float32, -stdv, stdv)
        self.bias = (jax.random.uniform(bkey, (out_channels,), jnp.float32,
                                        -stdv, stdv) if bias else None)

        # Folded, padded weights / bias: computed once, reused every call.
        K, cin, cout = self.kernel_volume, in_channels, out_channels
        if K == 1:
            self._k_pad = 1                  # contraction = Cin (full-dim block is legal)
        else:
            step = LANE // math.gcd(cin, LANE)
            self._k_pad = ((K + step - 1) // step) * step   # lane-aligned contraction
        self._kc = self._k_pad * cin
        w_k = jnp.reshape(self.kernel, (K, cin, cout))
        w_pad = jnp.zeros((self._k_pad, cin, LANE), jnp.float32)
        w_pad = w_pad.at[:K, :, :cout].set(w_k)
        self._w_flat = w_pad.reshape(self._kc, LANE).astype(jnp.bfloat16)
        b_pad = jnp.zeros((1, LANE), jnp.float32)
        if self.bias is not None:
            b_pad = b_pad.at[0, :cout].set(self.bias)
        self._b_pad = b_pad

    # -- glue: kernel map (what mapping_d1/d2_cuda produce), vectorized numpy --
    def _offsets(self):
        kd, kh, kw = self.kernel_size
        offs = []
        for px in range(kd):            # handles even kernel sizes too
            for py in range(kh):
                for pz in range(kw):
                    offs.append((px - kd // 2, py - kh // 2, pz - kw // 2))
        return offs

    def _build_gather_index(self, coords_np):
        """coords_np: (nnz, 4) int.  Returns (nnz, K) int32 gather indices into
        the input rows; missing neighbors point at row `nnz` (a zero row)."""
        coords = np.asarray(coords_np, dtype=np.int64)
        nnz = coords.shape[0]
        K = self.kernel_volume
        pad = int(max(self.kernel_size))
        mins = coords.min(axis=0)
        shifted = coords - mins + pad                    # neighbors stay >= 0
        dims = shifted.max(axis=0) + pad + 1             # per-axis extents
        s2 = int(dims[3])
        s1 = int(dims[2]) * s2
        s0 = int(dims[1]) * s1
        keys = shifted[:, 0] * s0 + shifted[:, 1] * s1 + shifted[:, 2] * s2 + shifted[:, 3]
        order = np.argsort(keys, kind="stable")
        skeys = keys[order]
        gidx = np.full((nnz, K), nnz, dtype=np.int32)    # default -> zero row
        for k, (dx, dy, dz) in enumerate(self._offsets()):
            nkeys = keys + dx * s1 + dy * s2 + dz
            pos = np.searchsorted(skeys, nkeys)
            pos_c = np.clip(pos, 0, nnz - 1)
            hit = skeys[pos_c] == nkeys
            gidx[:, k] = np.where(hit, order[pos_c].astype(np.int32), np.int32(nnz))
        return gidx

    def __call__(self, coords, feats):
        """coords: (nnz, 4) int32, feats: (nnz, Cin) float32 -> (nnz, Cout) f32."""
        coords_np = np.asarray(coords)
        feats = jnp.asarray(feats, jnp.float32)
        nnz, cin = feats.shape
        assert cin == self.in_channels
        cout = self.out_channels
        K = self.kernel_volume

        if K == 1:
            gidx = np.arange(nnz, dtype=np.int32)[:, None]        # identity map
        else:
            gidx = self._build_gather_index(coords_np)            # (nnz, K)

        # Pad rows to a tile multiple and K to k_pad.  All padding is on the
        # small index array; padded entries point at the zero row, so they
        # contribute nothing to the output.
        tn = _choose_row_tile(nnz, self._kc)
        n_pad = ((nnz + tn - 1) // tn) * tn
        gidx_full = np.full((n_pad, self._k_pad), nnz, dtype=np.int32)
        gidx_full[:nnz, :K] = gidx

        # bf16 BEFORE the gather: no f32 (n_pad, k_pad, cin) slab can be made.
        feats_ext = jnp.concatenate(
            [feats.astype(jnp.bfloat16), jnp.zeros((1, cin), jnp.bfloat16)], axis=0)

        return _spconv_forward(feats_ext, jnp.asarray(gidx_full),
                               self._w_flat, self._b_pad,
                               tn=tn, nnz=nnz, cout=cout)


# ---------------------------------------------------------------------------
if __name__ == "__main__":
    key = jax.random.PRNGKey(0)

    # Deterministic sparse coordinate set: 2 batches, 5x5x5 grid, voxels with
    # even coordinate sum -> 126 active voxels.
    coords = []
    for b in range(2):
        for x in range(5):
            for y in range(5):
                for z in range(5):
                    if (x + y + z) % 2 == 0:
                        coords.append((b, x, y, z))
    coords = np.asarray(coords, dtype=np.int32)                   # (126, 4)
    nnz = coords.shape[0]

    in_channels, out_channels = 16, 32
    feats = jax.random.normal(key, (nnz, in_channels), jnp.float32)

    conv = Conv3dPallas(in_channels, out_channels, kernel_size=3,
                        stride=1, padding=1, bias=False,
                        key=jax.random.PRNGKey(1))

    out = jax.block_until_ready(conv(coords, feats))
    assert out.shape == (nnz, out_channels)

    # Host reference with identical gather -> matmul -> sum semantics, using the
    # same bf16 rounding of the MXU inputs (accumulation stays float32; the
    # kernel additionally rounds the stored output to bf16).
    gidx = conv._build_gather_index(coords)                       # (nnz, K)
    f_bf = np.asarray(feats.astype(jnp.bfloat16).astype(jnp.float32))
    w_bf = np.asarray(conv.kernel.astype(jnp.bfloat16).astype(jnp.float32))
    w_bf = w_bf.reshape(conv.kernel_volume, in_channels, out_channels)
    f_ext = np.concatenate([f_bf, np.zeros((1, in_channels), np.float32)], axis=0)
    ref = np.zeros((nnz, out_channels), np.float32)
    for k in range(conv.kernel_volume):
        ref += f_ext[gidx[:, k]] @ w_bf[k]

    np.testing.assert_allclose(np.asarray(out), ref, rtol=2e-2, atol=2e-2)
    print("KERNEL_OK")
</pallas_src>

<mosaic_0001>
module attributes {stable_mosaic.version = 11 : i64} {
  func.func @_spconv_kernel(%arg0: i32, %arg1: memref<128x512xbf16, #tpu.memory_space<vmem>>, %arg2: memref<512x128xbf16, #tpu.memory_space<vmem>>, %arg3: memref<1x128xf32, #tpu.memory_space<vmem>>, %arg4: memref<128x128xbf16, #tpu.memory_space<vmem>>) attributes {dimension_semantics = [#tpu.dimension_semantics<parallel>], iteration_bounds = array<i64: 1>, scalar_prefetch = 0 : i64, scratch_operands = 0 : i64, tpu.core_type = #tpu.core_type<tc>, window_params = [{transform_indices = @transform_0, window_bounds = array<i64: 128, 512>}, {pipeline_mode = #tpu.pipeline_mode<synchronous>, transform_indices = @transform_1, window_bounds = array<i64: 512, 128>}, {pipeline_mode = #tpu.pipeline_mode<synchronous>, transform_indices = @transform_2, window_bounds = array<i64: 1, 128>}, {transform_indices = @transform_3, window_bounds = array<i64: 128, 128>}]} {
    %c0 = arith.constant 0 : index
    %c0_0 = arith.constant 0 : index
    %0 = vector.load %arg1[%c0, %c0_0] : memref<128x512xbf16, #tpu.memory_space<vmem>>, vector<128x512xbf16>
    %c0_1 = arith.constant 0 : index
    %c0_2 = arith.constant 0 : index
    %1 = vector.load %arg2[%c0_1, %c0_2] : memref<512x128xbf16, #tpu.memory_space<vmem>>, vector<512x128xbf16>
    %cst = arith.constant dense<0.000000e+00> : vector<128x128xf32>
    %2 = tpu.matmul %0, %1, %cst {dimension_numbers = #tpu.dot_dimension_numbers<[1], [0], [0], [1], [0, 0, 1, 1], [], []>} : vector<128x512xbf16>, vector<512x128xbf16>, vector<128x128xf32> -> vector<128x128xf32>
    %c0_3 = arith.constant 0 : index
    %c0_4 = arith.constant 0 : index
    %3 = vector.load %arg3[%c0_3, %c0_4] : memref<1x128xf32, #tpu.memory_space<vmem>>, vector<1x128xf32>
    %4 = vector.broadcast %3 : vector<1x128xf32> to vector<128x128xf32>
    %5 = arith.addf %2, %4 : vector<128x128xf32>
    %6 = arith.truncf %5 : vector<128x128xf32> to vector<128x128xbf16>
    %c0_5 = arith.constant 0 : index
    %c0_6 = arith.constant 0 : index
    %7 = vector.load %arg4[%c0_5, %c0_6] : memref<128x128xbf16, #tpu.memory_space<vmem>>, vector<128x128xbf16>
    tpu.vector_store %arg4[%c0_5, %c0_6], %6 {strides = array<i32>} : memref<128x128xbf16, #tpu.memory_space<vmem>>, vector<128x128xbf16>,
    return
  }
  func.func @transform_0(%arg0: i32) -> (i32, i32) {
    %c0_i32 = arith.constant 0 : i32
    %c0_i32_0 = arith.constant 0 : i32
    return %arg0, %c0_i32 : i32, i32
  }
  func.func @transform_1(%arg0: i32) -> (i32, i32) {
    %c0_i32 = arith.constant 0 : i32
    %c0_i32_0 = arith.constant 0 : i32
    %c0_i32_1 = arith.constant 0 : i32
    return %c0_i32, %c0_i32_0 : i32, i32
  }
  func.func @transform_2(%arg0: i32) -> (i32, i32) {
    %c0_i32 = arith.constant 0 : i32
    %c0_i32_0 = arith.constant 0 : i32
    %c0_i32_1 = arith.constant 0 : i32
    return %c0_i32, %c0_i32_0 : i32, i32
  }
  func.func @transform_3(%arg0: i32) -> (i32, i32) {
    %c0_i32 = arith.constant 0 : i32
    %c0_i32_0 = arith.constant 0 : i32
    return %arg0, %c0_i32 : i32, i32
  }
}

</mosaic_0001>

<llo_original>
// kernel: _spconv_forward.1
$region0: #{_spconv_forward.1}
  #allocation0 [shape = 'u32[]', space=smem, size = 0x4, offset = 0x4, fixed_abs, tag = 'smem constant byte address 0x4 - core index']
  #allocation1 [shape = 'u32[144,128]{1,0:T(1,128)}', space=vmem, size = 0x12000, scoped, tag = 'internal scratch']
  %s0 = inlined_call_operand.vmem [shape: bf16[128,512], index: 0, kind: input, shape index: {}]
  %s1 = inlined_call_operand.vmem [shape: bf16[512,128], index: 1, kind: input, shape index: {}]
  %s2 = inlined_call_operand.vmem [shape: f32[1,128], index: 2, kind: input, shape index: {}]
  %s3 = inlined_call_operand.vmem [shape: bf16[128,128], index: 3, kind: output, shape index: {}]
  %s4 = sld [smem:[#allocation0]]
  $region22: #{_spconv_forward.1} parent=0
    _
  %s6 = ssub.s32 1, %s4
  %s7 = scalar_select 0, %s6, %s4
  // Predicated region
  $region2: #{_spconv_forward.1} parent=0 // pred_check
    _
  $region3: #{_spconv_forward.1} parent=0 // pred_check_branch
    %9 = sbr.rel (0) target = $region5
  $region4: #{_spconv_forward.1} parent=0 // pred_region
    _
  $region5: #{_spconv_forward.1} parent=0 // pred_fallthru
    _
  // Predicated region
  $region6: #{_spconv_forward.1} parent=0 // pred_check
    _
  $region7: #{_spconv_forward.1} parent=0 // pred_check_branch
    %11 = sbr.rel (0) target = $region9
  $region8: #{_spconv_forward.1} parent=0 // pred_region
    _
  $region9: #{_spconv_forward.1} parent=0 // pred_fallthru
    _
  // Predicated region
  $region10: #{_spconv_forward.1} parent=0 // pred_check
    _
  $region11: #{_spconv_forward.1} parent=0 // pred_check_branch
    %13 = sbr.rel (0) target = $region13
  $region12: #{_spconv_forward.1} parent=0 // pred_region
    _
  $region13: #{_spconv_forward.1} parent=0 // pred_fallthru
    _
  %v15 = vld [vmem:[%s0] sm:$0xff]
  %v16 = vld [vmem:[%s0 + $0x8] sm:$0xff]
  %v17 = vld [vmem:[%s0 + $0x10] sm:$0xff]
  %v18 = vld [vmem:[%s0 + $0x18] sm:$0xff]
  %v19 = vld [vmem:[%s0 + $0x20] sm:$0xff]
  %v20 = vld [vmem:[%s0 + $0x28] sm:$0xff]
  %v21 = vld [vmem:[%s0 + $0x30] sm:$0xff]
  %v22 = vld [vmem:[%s0 + $0x38] sm:$0xff]
  %v23 = vld [vmem:[%s0 + $0x40] sm:$0xff]
  %v24 = vld [vmem:[%s0 + $0x48] sm:$0xff]
  %v25 = vld [vmem:[%s0 + $0x50] sm:$0xff]
  %v26 = vld [vmem:[%s0 + $0x58] sm:$0xff]
  %v27 = vld [vmem:[%s0 + $0x60] sm:$0xff]
  %v28 = vld [vmem:[%s0 + $0x68] sm:$0xff]
  %v29 = vld [vmem:[%s0 + $0x70] sm:$0xff]
  %v30 = vld [vmem:[%s0 + $0x78] sm:$0xff]
  %v31 = vld [vmem:[%s0 + $0x80] sm:$0xff]
  %v32 = vld [vmem:[%s0 + $0x88] sm:$0xff]
  %v33 = vld [vmem:[%s0 + $0x90] sm:$0xff]
  %v34 = vld [vmem:[%s0 + $0x98] sm:$0xff]
  %v35 = vld [vmem:[%s0 + $0xa0] sm:$0xff]
  %v36 = vld [vmem:[%s0 + $0xa8] sm:$0xff]
  %v37 = vld [vmem:[%s0 + $0xb0] sm:$0xff]
  %v38 = vld [vmem:[%s0 + $0xb8] sm:$0xff]
  %v39 = vld [vmem:[%s0 + $0xc0] sm:$0xff]
  %v40 = vld [vmem:[%s0 + $0xc8] sm:$0xff]
  %v41 = vld [vmem:[%s0 + $0xd0] sm:$0xff]
  %v42 = vld [vmem:[%s0 + $0xd8] sm:$0xff]
  %v43 = vld [vmem:[%s0 + $0xe0] sm:$0xff]
  %v44 = vld [vmem:[%s0 + $0xe8] sm:$0xff]
  %v45 = vld [vmem:[%s0 + $0xf0] sm:$0xff]
  %v46 = vld [vmem:[%s0 + $0xf8] sm:$0xff]
  %v47 = vld [vmem:[%s1] sm:$0xf]
  %v48 = vld [vmem:[%s1 + $0x4] sm:$0xf]
  %v49 = vld [vmem:[%s1 + $0x8] sm:$0xf]
  %v50 = vld [vmem:[%s1 + $0xc] sm:$0xf]
  %v51 = vld [vmem:[%s1 + $0x10] sm:$0xf]
  %v52 = vld [vmem:[%s1 + $0x14] sm:$0xf]
  %v53 = vld [vmem:[%s1 + $0x18] sm:$0xf]
  %v54 = vld [vmem:[%s1 + $0x1c] sm:$0xf]
  %v55 = vld [vmem:[%s1 + $0x20] sm:$0xf]
  %v56 = vld [vmem:[%s1 + $0x24] sm:$0xf]
  %v57 = vld [vmem:[%s1 + $0x28] sm:$0xf]
  %v58 = vld [vmem:[%s1 + $0x2c] sm:$0xf]
  %v59 = vld [vmem:[%s1 + $0x30] sm:$0xf]
  %v60 = vld [vmem:[%s1 + $0x34] sm:$0xf]
  %v61 = vld [vmem:[%s1 + $0x38] sm:$0xf]
  %v62 = vld [vmem:[%s1 + $0x3c] sm:$0xf]
  %v63 = vld [vmem:[%s1 + $0x40] sm:$0xf]
  %v64 = vld [vmem:[%s1 + $0x44] sm:$0xf]
  %v65 = vld [vmem:[%s1 + $0x48] sm:$0xf]
  %v66 = vld [vmem:[%s1 + $0x4c] sm:$0xf]
  %v67 = vld [vmem:[%s1 + $0x50] sm:$0xf]
  %v68 = vld [vmem:[%s1 + $0x54] sm:$0xf]
  %v69 = vld [vmem:[%s1 + $0x58] sm:$0xf]
  %v70 = vld [vmem:[%s1 + $0x5c] sm:$0xf]
  %v71 = vld [vmem:[%s1 + $0x60] sm:$0xf]
  %v72 = vld [vmem:[%s1 + $0x64] sm:$0xf]
  %v73 = vld [vmem:[%s1 + $0x68] sm:$0xf]
  %v74 = vld [vmem:[%s1 + $0x6c] sm:$0xf]
  %v75 = vld [vmem:[%s1 + $0x70] sm:$0xf]
  %v76 = vld [vmem:[%s1 + $0x74] sm:$0xf]
  %v77 = vld [vmem:[%s1 + $0x78] sm:$0xf]
  %v78 = vld [vmem:[%s1 + $0x7c] sm:$0xf]
  %v79 = vld [vmem:[%s1 + $0x80] sm:$0xf]
  %v80 = vld [vmem:[%s1 + $0x84] sm:$0xf]
  %v81 = vld [vmem:[%s1 + $0x88] sm:$0xf]
  %v82 = vld [vmem:[%s1 + $0x8c] sm:$0xf]
  %v83 = vld [vmem:[%s1 + $0x90] sm:$0xf]
  %v84 = vld [vmem:[%s1 + $0x94] sm:$0xf]
  %v85 = vld [vmem:[%s1 + $0x98] sm:$0xf]
  %v86 = vld [vmem:[%s1 + $0x9c] sm:$0xf]
  %v87 = vld [vmem:[%s1 + $0xa0] sm:$0xf]
  %v88 = vld [vmem:[%s1 + $0xa4] sm:$0xf]
  %v89 = vld [vmem:[%s1 + $0xa8] sm:$0xf]
  %v90 = vld [vmem:[%s1 + $0xac] sm:$0xf]
  %v91 = vld [vmem:[%s1 + $0xb0] sm:$0xf]
  %v92 = vld [vmem:[%s1 + $0xb4] sm:$0xf]
  %v93 = vld [vmem:[%s1 + $0xb8] sm:$0xf]
  %v94 = vld [vmem:[%s1 + $0xbc] sm:$0xf]
  %v95 = vld [vmem:[%s1 + $0xc0] sm:$0xf]
  %v96 = vld [vmem:[%s1 + $0xc4] sm:$0xf]
  %v97 = vld [vmem:[%s1 + $0xc8] sm:$0xf]
  %v98 = vld [vmem:[%s1 + $0xcc] sm:$0xf]
  %v99 = vld [vmem:[%s1 + $0xd0] sm:$0xf]
  %v100 = vld [vmem:[%s1 + $0xd4] sm:$0xf]
  %v101 = vld [vmem:[%s1 + $0xd8] sm:$0xf]
  %v102 = vld [vmem:[%s1 + $0xdc] sm:$0xf]
  %v103 = vld [vmem:[%s1 + $0xe0] sm:$0xf]
  %v104 = vld [vmem:[%s1 + $0xe4] sm:$0xf]
  %v105 = vld [vmem:[%s1 + $0xe8] sm:$0xf]
  %v106 = vld [vmem:[%s1 + $0xec] sm:$0xf]
  %v107 = vld [vmem:[%s1 + $0xf0] sm:$0xf]
  %v108 = vld [vmem:[%s1 + $0xf4] sm:$0xf]
  %v109 = vld [vmem:[%s1 + $0xf8] sm:$0xf]
  %v110 = vld [vmem:[%s1 + $0xfc] sm:$0xf]
  %v111 = vld [vmem:[%s2] sm:$0x1]
  %v113 = vlaneseq
  %v114 = vshrl.u32 %v113, 7
  %v115 = vsub.s32 0, %v114
  %v116 = vrot.slane %v111, %v115
  %v150 = vunpack.c.l.b16 %v15
  %v151 = vunpack.c.h.b16 %v15
  %v152 = vunpack.c.l.b16 %v16
  %v153 = vunpack.c.h.b16 %v16
  %v154 = vunpack.c.l.b16 %v17
  %v155 = vunpack.c.h.b16 %v17
  %v156 = vunpack.c.l.b16 %v18
  %v157 = vunpack.c.h.b16 %v18
  %v158 = vunpack.c.l.b16 %v19
  %v159 = vunpack.c.h.b16 %v19
  %v160 = vunpack.c.l.b16 %v20
  %v161 = vunpack.c.h.b16 %v20
  %v162 = vunpack.c.l.b16 %v21
  %v163 = vunpack.c.h.b16 %v21
  %v164 = vunpack.c.l.b16 %v22
  %v165 = vunpack.c.h.b16 %v22
  %v166 = vunpack.c.l.b16 %v23
  %v167 = vunpack.c.h.b16 %v23
  %v168 = vunpack.c.l.b16 %v24
  %v169 = vunpack.c.h.b16 %v24
  %v170 = vunpack.c.l.b16 %v25
  %v171 = vunpack.c.h.b16 %v25
  %v172 = vunpack.c.l.b16 %v26
  %v173 = vunpack.c.h.b16 %v26
  %v174 = vunpack.c.l.b16 %v27
  %v175 = vunpack.c.h.b16 %v27
  %v176 = vunpack.c.l.b16 %v28
  %v177 = vunpack.c.h.b16 %v28
  %v178 = vunpack.c.l.b16 %v29
  %v179 = vunpack.c.h.b16 %v29
  %v180 = vunpack.c.l.b16 %v30
  %v181 = vunpack.c.h.b16 %v30
  %v182 = vunpack.c.l.b16 %v31
  %v183 = vunpack.c.h.b16 %v31
  %v184 = vunpack.c.l.b16 %v32
  %v185 = vunpack.c.h.b16 %v32
  %v186 = vunpack.c.l.b16 %v33
  %v187 = vunpack.c.h.b16 %v33
  %v188 = vunpack.c.l.b16 %v34
  %v189 = vunpack.c.h.b16 %v34
  %v190 = vunpack.c.l.b16 %v35
  %v191 = vunpack.c.h.b16 %v35
  %v192 = vunpack.c.l.b16 %v36
  %v193 = vunpack.c.h.b16 %v36
  %v194 = vunpack.c.l.b16 %v37
  %v195 = vunpack.c.h.b16 %v37
  %v196 = vunpack.c.l.b16 %v38
  %v197 = vunpack.c.h.b16 %v38
  %v198 = vunpack.c.l.b16 %v39
  %v199 = vunpack.c.h.b16 %v39
  %v200 = vunpack.c.l.b16 %v40
  %v201 = vunpack.c.h.b16 %v40
  %v202 = vunpack.c.l.b16 %v41
  %v203 = vunpack.c.h.b16 %v41
  %v204 = vunpack.c.l.b16 %v42
  %v205 = vunpack.c.h.b16 %v42
  %v206 = vunpack.c.l.b16 %v43
  %v207 = vunpack.c.h.b16 %v43
  %v208 = vunpack.c.l.b16 %v44
  %v209 = vunpack.c.h.b16 %v44
  %v210 = vunpack.c.l.b16 %v45
  %v211 = vunpack.c.h.b16 %v45
  %v212 = vunpack.c.l.b16 %v46
  %v213 = vunpack.c.h.b16 %v46
  %v214 = vpack.c.b16 %v154, %v150
  %v215 = vpack.c.b16 %v155, %v151
  %v216 = vpack.c.b16 %v156, %v152
  %v217 = vpack.c.b16 %v157, %v153
  %v218 = vpack.c.b16 %v162, %v158
  %v219 = vpack.c.b16 %v163, %v159
  %v220 = vpack.c.b16 %v164, %v160
  %v221 = vpack.c.b16 %v165, %v161
  %v222 = vpack.c.b16 %v170, %v166
  %v223 = vpack.c.b16 %v171, %v167
  %v224 = vpack.c.b16 %v172, %v168
  %v225 = vpack.c.b16 %v173, %v169
  %v226 = vpack.c.b16 %v178, %v174
  %v227 = vpack.c.b16 %v179, %v175
  %v228 = vpack.c.b16 %v180, %v176
  %v229 = vpack.c.b16 %v181, %v177
  %v230 = vpack.c.b16 %v186, %v182
  %v231 = vpack.c.b16 %v187, %v183
  %v232 = vpack.c.b16 %v188, %v184
  %v233 = vpack.c.b16 %v189, %v185
  %v234 = vpack.c.b16 %v194, %v190
  %v235 = vpack.c.b16 %v195, %v191
  %v236 = vpack.c.b16 %v196, %v192
  %v237 = vpack.c.b16 %v197, %v193
  %v238 = vpack.c.b16 %v202, %v198
  %v239 = vpack.c.b16 %v203, %v199
  %v240 = vpack.c.b16 %v204, %v200
  %v241 = vpack.c.b16 %v205, %v201
  %v242 = vpack.c.b16 %v210, %v206
  %v243 = vpack.c.b16 %v211, %v207
  %v244 = vpack.c.b16 %v212, %v208
  %v245 = vpack.c.b16 %v213, %v209
  %v342 = vunpack.c.l.b16 %v47
  %v343 = vunpack.c.l.b16 %v48
  %v344 = vunpack.c.l.b16 %v49
  %v345 = vunpack.c.l.b16 %v50
  %v346 = vunpack.c.l.b16 %v51
  %v347 = vunpack.c.l.b16 %v52
  %v348 = vunpack.c.l.b16 %v53
  %v349 = vunpack.c.l.b16 %v54
  %v350 = vunpack.c.l.b16 %v55
  %v351 = vunpack.c.l.b16 %v56
  %v352 = vunpack.c.l.b16 %v57
  %v353 = vunpack.c.l.b16 %v58
  %v354 = vunpack.c.l.b16 %v59
  %v355 = vunpack.c.l.b16 %v60
  %v356 = vunpack.c.l.b16 %v61
  %v357 = vunpack.c.l.b16 %v62
  %v358 = vunpack.c.l.b16 %v63
  %v359 = vunpack.c.l.b16 %v64
  %v360 = vunpack.c.l.b16 %v65
  %v361 = vunpack.c.l.b16 %v66
  %v362 = vunpack.c.l.b16 %v67
  %v363 = vunpack.c.l.b16 %v68
  %v364 = vunpack.c.l.b16 %v69
  %v365 = vunpack.c.l.b16 %v70
  %v366 = vunpack.c.l.b16 %v71
  %v367 = vunpack.c.l.b16 %v72
  %v368 = vunpack.c.l.b16 %v73
  %v369 = vunpack.c.l.b16 %v74
  %v370 = vunpack.c.l.b16 %v75
  %v371 = vunpack.c.l.b16 %v76
  %v372 = vunpack.c.l.b16 %v77
  %v373 = vunpack.c.l.b16 %v78
  %v374 = vunpack.c.l.b16 %v79
  %v375 = vunpack.c.l.b16 %v80
  %v376 = vunpack.c.l.b16 %v81
  %v377 = vunpack.c.l.b16 %v82
  %v378 = vunpack.c.l.b16 %v83
  %v379 = vunpack.c.l.b16 %v84
  %v380 = vunpack.c.l.b16 %v85
  %v381 = vunpack.c.l.b16 %v86
  %v382 = vunpack.c.l.b16 %v87
  %v383 = vunpack.c.l.b16 %v88
  %v384 = vunpack.c.l.b16 %v89
  %v385 = vunpack.c.l.b16 %v90
  %v386 = vunpack.c.l.b16 %v91
  %v387 = vunpack.c.l.b16 %v92
  %v388 = vunpack.c.l.b16 %v93
  %v389 = vunpack.c.l.b16 %v94
  %v390 = vunpack.c.l.b16 %v95
  %v391 = vunpack.c.l.b16 %v96
  %v392 = vunpack.c.l.b16 %v97
  %v393 = vunpack.c.l.b16 %v98
  %v394 = vunpack.c.l.b16 %v99
  %v395 = vunpack.c.l.b16 %v100
  %v396 = vunpack.c.l.b16 %v101
  %v397 = vunpack.c.l.b16 %v102
  %v398 = vunpack.c.l.b16 %v103
  %v399 = vunpack.c.l.b16 %v104
  %v400 = vunpack.c.l.b16 %v105
  %v401 = vunpack.c.l.b16 %v106
  %v402 = vunpack.c.l.b16 %v107
  %v403 = vunpack.c.l.b16 %v108
  %v404 = vunpack.c.l.b16 %v109
  %v405 = vunpack.c.l.b16 %v110
  %v406 = vpack.c.b16 %v343, %v342
  %v407 = vpack.c.b16 %v345, %v344
  %v408 = vpack.c.b16 %v347, %v346
  %v409 = vpack.c.b16 %v349, %v348
  %v410 = vpack.c.b16 %v351, %v350
  %v411 = vpack.c.b16 %v353, %v352
  %v412 = vpack.c.b16 %v355, %v354
  %v413 = vpack.c.b16 %v357, %v356
  %v414 = vpack.c.b16 %v359, %v358
  %v415 = vpack.c.b16 %v361, %v360
  %v416 = vpack.c.b16 %v363, %v362
  %v417 = vpack.c.b16 %v365, %v364
  %v418 = vpack.c.b16 %v367, %v366
  %v419 = vpack.c.b16 %v369, %v368
  %v420 = vpack.c.b16 %v371, %v370
  %v421 = vpack.c.b16 %v373, %v372
  %v422 = vpack.c.b16 %v375, %v374
  %v423 = vpack.c.b16 %v377, %v376
  %v424 = vpack.c.b16 %v379, %v378
  %v425 = vpack.c.b16 %v381, %v380
  %v426 = vpack.c.b16 %v383, %v382
  %v427 = vpack.c.b16 %v385, %v384
  %v428 = vpack.c.b16 %v387, %v386
  %v429 = vpack.c.b16 %v389, %v388
  %v430 = vpack.c.b16 %v391, %v390
  %v431 = vpack.c.b16 %v393, %v392
  %v432 = vpack.c.b16 %v395, %v394
  %v433 = vpack.c.b16 %v397, %v396
  %v434 = vpack.c.b16 %v399, %v398
  %v435 = vpack.c.b16 %v401, %v400
  %v436 = vpack.c.b16 %v403, %v402
  %v437 = vpack.c.b16 %v405, %v404
  %470 = vmatprep.subr.bf16.mxu0 0
  %471 = vmatpush1.bf16.msra.mxu0 %v406
  %472 = vmatprep.subr.bf16.mxu0 0
  %473 = vmatpush1.bf16.msra.mxu0 %v407
  %474 = vmatprep.subr.bf16.mxu0 0
  %475 = vmatpush1.bf16.msra.mxu0 %v408
  %476 = vmatprep.subr.bf16.mxu0 0
  %477 = vmatpush1.bf16.msra.mxu0 %v409
  %478 = vmatprep.subr.bf16.mxu0 0
  %479 = vmatpush1.bf16.msra.mxu0 %v410
  %480 = vmatprep.subr.bf16.mxu0 0
  %481 = vmatpush1.bf16.msra.mxu0 %v411
  %482 = vmatprep.subr.bf16.mxu0 0
  %483 = vmatpush1.bf16.msra.mxu0 %v412
  %484 = vmatprep.subr.bf16.mxu0 0
  %485 = vmatpush1.bf16.msra.mxu0 %v413
  %486 = vmatprep.subr.bf16.mxu0 0
  %487 = vmatpush1.bf16.msra.mxu0 %v414
  %488 = vmatprep.subr.bf16.mxu0 0
  %489 = vmatpush1.bf16.msra.mxu0 %v415
  %490 = vmatprep.subr.bf16.mxu0 0
  %491 = vmatpush1.bf16.msra.mxu0 %v416
  %492 = vmatprep.subr.bf16.mxu0 0
  %493 = vmatpush1.bf16.msra.mxu0 %v417
  %494 = vmatprep.subr.bf16.mxu0 0
  %495 = vmatpush1.bf16.msra.mxu0 %v418
  %496 = vmatprep.subr.bf16.mxu0 0
  %497 = vmatpush1.bf16.msra.mxu0 %v419
  %498 = vmatprep.subr.bf16.mxu0 0
  %499 = vmatpush1.bf16.msra.mxu0 %v420
  %500 = vmatprep.subr.bf16.mxu0 0
  %501 = vmatpush1.bf16.msra.mxu0 %v421
  %502 = vmatprep.mubr.bf16.mxu0 %v215
  %503 = vmatmul.mubr.bf16.gmra.mrb[0].mxu0 %v214
  %v504 = vpop.f32.mrb[0].mxu0
  %v505 = vadd.f32 %v116, %v504
  %v506 = vpop.f32.mrb[0].mxu0
  %v507 = vpop.f32.mrb[0].mxu0
  %v508 = vadd.f32 %v116, %v507
  %v509 = vpop.f32.mrb[0].mxu0
  %510 = vmatprep.mubr.bf16.mxu0 %v219
  %511 = vmatmul.mubr.bf16.gmra.mrb[0].mxu0 %v218
  %v512 = vpop.f32.mrb[0].mxu0
  %v513 = vadd.f32 %v116, %v512
  %v514 = vpop.f32.mrb[0].mxu0
  %v515 = vpop.f32.mrb[0].mxu0
  %v516 = vadd.f32 %v116, %v515
  %v517 = vpop.f32.mrb[0].mxu0
  %518 = vmatprep.mubr.bf16.mxu0 %v223
  %519 = vmatmul.mubr.bf16.gmra.mrb[0].mxu0 %v222
  %v520 = vpop.f32.mrb[0].mxu0
  %v521 = vadd.f32 %v116, %v520
  %v522 = vpop.f32.mrb[0].mxu0
  %v523 = vpop.f32.mrb[0].mxu0
  %v524 = vadd.f32 %v116, %v523
  %v525 = vpop.f32.mrb[0].mxu0
  %526 = vmatprep.mubr.bf16.mxu0 %v227
  %527 = vmatmul.mubr.bf16.gmra.mrb[0].mxu0 %v226
  %v528 = vpop.f32.mrb[0].mxu0
  %v529 = vadd.f32 %v116, %v528
  %v530 = vpop.f32.mrb[0].mxu0
  %v531 = vpop.f32.mrb[0].mxu0
  %v532 = vadd.f32 %v116, %v531
  %v533 = vpop.f32.mrb[0].mxu0
  %534 = vmatprep.mubr.bf16.mxu0 %v231
  %535 = vmatmul.mubr.bf16.gmra.mrb[0].mxu0 %v230
  %v536 = vpop.f32.mrb[0].mxu0
  %v537 = vadd.f32 %v116, %v536
  %v538 = vpop.f32.mrb[0].mxu0
  %v539 = vpop.f32.mrb[0].mxu0
  %v540 = vadd.f32 %v116, %v539
  %v541 = vpop.f32.mrb[0].mxu0
  %542 = vmatprep.mubr.bf16.mxu0 %v235
  %543 = vmatmul.mubr.bf16.gmra.mrb[0].mxu0 %v234
  %v544 = vpop.f32.mrb[0].mxu0
  %v545 = vadd.f32 %v116, %v544
  %v546 = vpop.f32.mrb[0].mxu0
  %v547 = vpop.f32.mrb[0].mxu0
  %v548 = vadd.f32 %v116, %v547
  %v549 = vpop.f32.mrb[0].mxu0
  %550 = vmatprep.mubr.bf16.mxu0 %v239
  %551 = vmatmul.mubr.bf16.gmra.mrb[0].mxu0 %v238
  %v552 = vpop.f32.mrb[0].mxu0
  %v553 = vadd.f32 %v116, %v552
  %v554 = vpop.f32.mrb[0].mxu0
  %v555 = vpop.f32.mrb[0].mxu0
  %v556 = vadd.f32 %v116, %v555
  %v557 = vpop.f32.mrb[0].mxu0
  %558 = vmatprep.mubr.bf16.mxu0 %v243
  %559 = vmatmul.mubr.bf16.gmra.mrb[0].mxu0 %v242
  %v560 = vpop.f32.mrb[0].mxu0
  %v561 = vadd.f32 %v116, %v560
  %v562 = vpop.f32.mrb[0].mxu0
  %v563 = vpop.f32.mrb[0].mxu0
  %v564 = vadd.f32 %v116, %v563
  %v565 = vpop.f32.mrb[0].mxu0
  %566 = vdwg.mxu0
  %567 = vmatprep.subr.bf16.mxu0 0
  %568 = vmatpush1.bf16.msra.mxu0 %v422
  %569 = vmatprep.subr.bf16.mxu0 0
  %570 = vmatpush1.bf16.msra.mxu0 %v423
  %571 = vmatprep.subr.bf16.mxu0 0
  %572 = vmatpush1.bf16.msra.mxu0 %v424
  %573 = vmatprep.subr.bf16.mxu0 0
  %574 = vmatpush1.bf16.msra.mxu0 %v425
  %575 = vmatprep.subr.bf16.mxu0 0
  %576 = vmatpush1.bf16.msra.mxu0 %v426
  %577 = vmatprep.subr.bf16.mxu0 0
  %578 = vmatpush1.bf16.msra.mxu0 %v427
  %579 = vmatprep.subr.bf16.mxu0 0
  %580 = vmatpush1.bf16.msra.mxu0 %v428
  %581 = vmatprep.subr.bf16.mxu0 0
  %582 = vmatpush1.bf16.msra.mxu0 %v429
  %583 = vmatprep.subr.bf16.mxu0 0
  %584 = vmatpush1.bf16.msra.mxu0 %v430
  %585 = vmatprep.subr.bf16.mxu0 0
  %586 = vmatpush1.bf16.msra.mxu0 %v431
  %587 = vmatprep.subr.bf16.mxu0 0
  %588 = vmatpush1.bf16.msra.mxu0 %v432
  %589 = vmatprep.subr.bf16.mxu0 0
  %590 = vmatpush1.bf16.msra.mxu0 %v433
  %591 = vmatprep.subr.bf16.mxu0 0
  %592 = vmatpush1.bf16.msra.mxu0 %v434
  %593 = vmatprep.subr.bf16.mxu0 0
  %594 = vmatpush1.bf16.msra.mxu0 %v435
  %595 = vmatprep.subr.bf16.mxu0 0
  %596 = vmatpush1.bf16.msra.mxu0 %v436
  %597 = vmatprep.subr.bf16.mxu0 0
  %598 = vmatpush1.bf16.msra.mxu0 %v437
  %599 = vmatprep.mubr.bf16.mxu0 %v217
  %600 = vmatmul.mubr.bf16.gmra.mrb[0].mxu0 %v216
  %v601 = vpop.f32.mrb[0].mxu0
  %v602 = vadd.f32 %v505, %v601
  %v603 = vpop.f32.mrb[0].mxu0
  %v604 = vpop.f32.mrb[0].mxu0
  %v605 = vadd.f32 %v508, %v604
  %v606 = vpop.f32.mrb[0].mxu0
  %607 = vmatprep.mubr.bf16.mxu0 %v221
  %608 = vmatmul.mubr.bf16.gmra.mrb[0].mxu0 %v220
  %v609 = vpop.f32.mrb[0].mxu0
  %v610 = vadd.f32 %v513, %v609
  %v611 = vpop.f32.mrb[0].mxu0
  %v612 = vpop.f32.mrb[0].mxu0
  %v613 = vadd.f32 %v516, %v612
  %v614 = vpop.f32.mrb[0].mxu0
  %615 = vmatprep.mubr.bf16.mxu0 %v225
  %616 = vmatmul.mubr.bf16.gmra.mrb[0].mxu0 %v224
  %v617 = vpop.f32.mrb[0].mxu0
  %v618 = vadd.f32 %v521, %v617
  %v619 = vpop.f32.mrb[0].mxu0
  %v620 = vpop.f32.mrb[0].mxu0
  %v621 = vadd.f32 %v524, %v620
  %v622 = vpop.f32.mrb[0].mxu0
  %623 = vmatprep.mubr.bf16.mxu0 %v229
  %624 = vmatmul.mubr.bf16.gmra.mrb[0].mxu0 %v228
  %v625 = vpop.f32.mrb[0].mxu0
  %v626 = vadd.f32 %v529, %v625
  %v627 = vpop.f32.mrb[0].mxu0
  %v628 = vpop.f32.mrb[0].mxu0
  %v629 = vadd.f32 %v532, %v628
  %v630 = vpop.f32.mrb[0].mxu0
  %631 = vmatprep.mubr.bf16.mxu0 %v233
  %632 = vmatmul.mubr.bf16.gmra.mrb[0].mxu0 %v232
  %v633 = vpop.f32.mrb[0].mxu0
  %v634 = vadd.f32 %v537, %v633
  %v635 = vpop.f32.mrb[0].mxu0
  %v636 = vpop.f32.mrb[0].mxu0
  %v637 = vadd.f32 %v540, %v636
  %v638 = vpop.f32.mrb[0].mxu0
  %639 = vmatprep.mubr.bf16.mxu0 %v237
  %640 = vmatmul.mubr.bf16.gmra.mrb[0].mxu0 %v236
  %v641 = vpop.f32.mrb[0].mxu0
  %v642 = vadd.f32 %v545, %v641
  %v643 = vpop.f32.mrb[0].mxu0
  %v644 = vpop.f32.mrb[0].mxu0
  %v645 = vadd.f32 %v548, %v644
  %v646 = vpop.f32.mrb[0].mxu0
  %647 = vmatprep.mubr.bf16.mxu0 %v241
  %648 = vmatmul.mubr.bf16.gmra.mrb[0].mxu0 %v240
  %v649 = vpop.f32.mrb[0].mxu0
  %v650 = vadd.f32 %v553, %v649
  %v651 = vpop.f32.mrb[0].mxu0
  %v652 = vpop.f32.mrb[0].mxu0
  %v653 = vadd.f32 %v556, %v652
  %v654 = vpop.f32.mrb[0].mxu0
  %655 = vmatprep.mubr.bf16.mxu0 %v245
  %656 = vmatmul.mubr.bf16.gmra.mrb[0].mxu0 %v244
  %v657 = vpop.f32.mrb[0].mxu0
  %v658 = vadd.f32 %v561, %v657
  %v659 = vpop.f32.mrb[0].mxu0
  %v660 = vpop.f32.mrb[0].mxu0
  %v661 = vadd.f32 %v564, %v660
  %v662 = vpop.f32.mrb[0].mxu0
  %663 = vdwg.mxu0
  %v664 = vpack.c.bf16 %v605, %v602
  %v665 = vpack.c.bf16 %v613, %v610
  %v666 = vpack.c.bf16 %v621, %v618
  %v667 = vpack.c.bf16 %v629, %v626
  %v668 = vpack.c.bf16 %v637, %v634
  %v669 = vpack.c.bf16 %v645, %v642
  %v670 = vpack.c.bf16 %v653, %v650
  %v671 = vpack.c.bf16 %v661, %v658
  %v680 = vunpack.c.l.b16 %v664
  %v681 = vunpack.c.h.b16 %v664
  %v682 = vunpack.c.l.b16 %v665
  %v683 = vunpack.c.h.b16 %v665
  %v684 = vunpack.c.l.b16 %v666
  %v685 = vunpack.c.h.b16 %v666
  %v686 = vunpack.c.l.b16 %v667
  %v687 = vunpack.c.h.b16 %v667
  %v688 = vunpack.c.l.b16 %v668
  %v689 = vunpack.c.h.b16 %v668
  %v690 = vunpack.c.l.b16 %v669
  %v691 = vunpack.c.h.b16 %v669
  %v692 = vunpack.c.l.b16 %v670
  %v693 = vunpack.c.h.b16 %v670
  %v694 = vunpack.c.l.b16 %v671
  %v695 = vunpack.c.h.b16 %v671
  %v696 = vpack.c.b16 %v680, %v680
  %v697 = vpack.c.b16 %v681, %v681
  %v698 = vpack.c.b16 %v682, %v682
  %v699 = vpack.c.b16 %v683, %v683
  %v700 = vpack.c.b16 %v684, %v684
  %v701 = vpack.c.b16 %v685, %v685
  %v702 = vpack.c.b16 %v686, %v686
  %v703 = vpack.c.b16 %v687, %v687
  %v704 = vpack.c.b16 %v688, %v688
  %v705 = vpack.c.b16 %v689, %v689
  %v706 = vpack.c.b16 %v690, %v690
  %v707 = vpack.c.b16 %v691, %v691
  %v708 = vpack.c.b16 %v692, %v692
  %v709 = vpack.c.b16 %v693, %v693
  %v710 = vpack.c.b16 %v694, %v694
  %v711 = vpack.c.b16 %v695, %v695
  %728 = vst [vmem:[%s3] sm:$0xf] %v696
  %729 = vst [vmem:[%s3 + $0x4] sm:$0xf] %v697
  %730 = vst [vmem:[%s3 + $0x8] sm:$0xf] %v698
  %731 = vst [vmem:[%s3 + $0xc] sm:$0xf] %v699
  %732 = vst [vmem:[%s3 + $0x10] sm:$0xf] %v700
  %733 = vst [vmem:[%s3 + $0x14] sm:$0xf] %v701
  %734 = vst [vmem:[%s3 + $0x18] sm:$0xf] %v702
  %735 = vst [vmem:[%s3 + $0x1c] sm:$0xf] %v703
  %736 = vst [vmem:[%s3 + $0x20] sm:$0xf] %v704
  %737 = vst [vmem:[%s3 + $0x24] sm:$0xf] %v705
  %738 = vst [vmem:[%s3 + $0x28] sm:$0xf] %v706
  %739 = vst [vmem:[%s3 + $0x2c] sm:$0xf] %v707
  %740 = vst [vmem:[%s3 + $0x30] sm:$0xf] %v708
  %741 = vst [vmem:[%s3 + $0x34] sm:$0xf] %v709
  %742 = vst [vmem:[%s3 + $0x38] sm:$0xf] %v710
  %743 = vst [vmem:[%s3 + $0x3c] sm:$0xf] %v711
  // Predicated region
  $region14: #{_spconv_forward.1} parent=0 // pred_check
    _
  $region15: #{_spconv_forward.1} parent=0 // pred_check_branch
    %745 = sbr.rel (0) target = $region17
  $region16: #{_spconv_forward.1} parent=0 // pred_region
    _
  $region17: #{_spconv_forward.1} parent=0 // pred_fallthru
    _
  // Predicated region
  $region18: #{_spconv_forward.1} parent=0 // pred_check
    _
  $region19: #{_spconv_forward.1} parent=0 // pred_check_branch
    %747 = sbr.rel (0) target = $region21
  $region20: #{_spconv_forward.1} parent=0 // pred_region
    _
  $region21: #{_spconv_forward.1} parent=0 // pred_fallthru
    _

</llo_original>
